<compile_context>
chip_gen: v5e
topology: v5e:2x2
jax: 0.10.0
libtpu: 0.0.40
codegen_flags: <defaults>
</compile_context>

<pallas_src>
import jax
import jax.numpy as jnp
from jax.experimental import pallas as pl
from jax.experimental.pallas import tpu as pltpu

# ---- sizes implied by the module -------------------------------------------
_PLAYER_STATE_VECTOR_LEN = 24      # stand-in for state.PlayerState().to_array().shape[0]
_TRADE_VECTOR_LEN = 16             # trade-row slice length
_PLAYER_OUT = 32                   # player_module output features
_TRADE_OUT = 16                    # trade_module output features

_TOTAL_IN = 2 * _PLAYER_STATE_VECTOR_LEN + _TRADE_VECTOR_LEN        # 64
_TOTAL_OUT = 2 * _PLAYER_OUT + _TRADE_OUT                           # 80
_PADDED_OUT = 128                  # lane-dense output width (80 -> 128, zero cols)

# Default batch tile: multiple of 8, sized so (TB,64)+(TB,128) f32 double-buffered
# stays far below even the v7x 64 MiB VMEM budget (~1.6 MiB at TB=1024).
_DEFAULT_BLOCK_ROWS = 1024


def _round_up(n, m):
    return ((n + m - 1) // m) * m


# ---- kernel -----------------------------------------------------------------
def _player_state_kernel(x_ref, w_ref, b_ref, o_ref):
    """One batch tile: a single fused block-diagonal matmul + bias.

    x_ref : (TB, 64)   game-state rows
    w_ref : (64, 128)  blockdiag(wp, wp, wt), zero-padded to 128 output lanes
    b_ref : (1, 128)   [bp | bp | bt | zeros]
    o_ref : (TB, 128)  lane-dense output (valid columns: [0, 80))
    """
    o_ref[...] = (
        jnp.dot(x_ref[...], w_ref[...], preferred_element_type=jnp.float32)
        + b_ref[...]
    ).astype(o_ref.dtype)


# ---- wrapper ----------------------------------------------------------------
def player_state_module(x, w_player, b_player, w_trade, b_trade,
                        *, block_rows=_DEFAULT_BLOCK_ROWS):
    """Pallas wrapper. x: (B, 64) float32. Returns (B, 80) float32."""
    B = x.shape[0]
    PL, PO = _PLAYER_STATE_VECTOR_LEN, _PLAYER_OUT
    TO = _TRADE_OUT

    # Build the block-diagonal weight and concatenated bias once (wrapper-side,
    # fuses into cheap XLA pads/updates; amortized if the wrapper is jitted).
    w_blk = jnp.zeros((_TOTAL_IN, _PADDED_OUT), dtype=jnp.float32)
    w_blk = w_blk.at[:PL, :PO].set(w_player.astype(jnp.float32))
    w_blk = w_blk.at[PL:2 * PL, PO:2 * PO].set(w_player.astype(jnp.float32))
    w_blk = w_blk.at[2 * PL:, 2 * PO:2 * PO + TO].set(w_trade.astype(jnp.float32))

    b_blk = jnp.zeros((1, _PADDED_OUT), dtype=jnp.float32)
    b_blk = b_blk.at[0, :PO].set(b_player.astype(jnp.float32))
    b_blk = b_blk.at[0, PO:2 * PO].set(b_player.astype(jnp.float32))
    b_blk = b_blk.at[0, 2 * PO:2 * PO + TO].set(b_trade.astype(jnp.float32))

    # Batch tiling: multiple of 8 rows, padded so the grid covers B exactly.
    tb = min(block_rows, _round_up(max(B, 1), 8))
    b_pad = _round_up(max(B, 1), tb)
    x_f32 = x.astype(jnp.float32)
    if b_pad != B:
        x_f32 = jnp.pad(x_f32, ((0, b_pad - B), (0, 0)))

    grid = (b_pad // tb,)

    out_padded = pl.pallas_call(
        _player_state_kernel,
        out_shape=jax.ShapeDtypeStruct((b_pad, _PADDED_OUT), jnp.float32),
        grid=grid,
        in_specs=[
            pl.BlockSpec((tb, _TOTAL_IN), lambda i: (i, 0)),          # x tile
            pl.BlockSpec((_TOTAL_IN, _PADDED_OUT), lambda i: (0, 0)),  # weights (resident)
            pl.BlockSpec((1, _PADDED_OUT), lambda i: (0, 0)),          # bias (resident)
        ],
        out_specs=pl.BlockSpec((tb, _PADDED_OUT), lambda i: (i, 0)),
        compiler_params=pltpu.CompilerParams(
            dimension_semantics=("parallel",)),
    )(x_f32, w_blk, b_blk)

    # Strip batch padding and the 48 zero output lanes.
    return out_padded[:B, :_TOTAL_OUT]


# ---- reference (plain JAX) ---------------------------------------------------
def player_state_module_ref(x, w_player, b_player, w_trade, b_trade):
    p1 = x[:, :_PLAYER_STATE_VECTOR_LEN] @ w_player + b_player
    p2 = x[:, _PLAYER_STATE_VECTOR_LEN:2 * _PLAYER_STATE_VECTOR_LEN] @ w_player + b_player
    tr = x[:, 2 * _PLAYER_STATE_VECTOR_LEN:] @ w_trade + b_trade
    return jnp.concatenate([p1, p2, tr], axis=1)


if __name__ == "__main__":
    key = jax.random.PRNGKey(0)
    kx, kwp, kbp, kwt, kbt = jax.random.split(key, 5)

    batch = 2
    x = jax.random.normal(kx, (batch, _TOTAL_IN), dtype=jnp.float32)

    # deterministic synthetic Linear parameters; (in, out) layout = torch W^T
    w_player = jax.random.normal(kwp, (_PLAYER_STATE_VECTOR_LEN, _PLAYER_OUT),
                                 dtype=jnp.float32) * 0.1
    b_player = jax.random.normal(kbp, (_PLAYER_OUT,), dtype=jnp.float32) * 0.1
    w_trade = jax.random.normal(kwt, (_TRADE_VECTOR_LEN, _TRADE_OUT),
                                dtype=jnp.float32) * 0.1
    b_trade = jax.random.normal(kbt, (_TRADE_OUT,), dtype=jnp.float32) * 0.1

    out = player_state_module(x, w_player, b_player, w_trade, b_trade)
    out = jax.block_until_ready(out)

    ref = player_state_module_ref(x, w_player, b_player, w_trade, b_trade)
    assert out.shape == (batch, _TOTAL_OUT), out.shape
    assert jnp.allclose(out, ref, atol=1e-5, rtol=1e-5), "mismatch vs reference"

    # Also exercise the batch-tiled path (B not a multiple of the tile / > 1 tile).
    big_b = 2048 + 13
    xb = jax.random.normal(kx, (big_b, _TOTAL_IN), dtype=jnp.float32)
    out_b = jax.block_until_ready(
        player_state_module(xb, w_player, b_player, w_trade, b_trade))
    ref_b = player_state_module_ref(xb, w_player, b_player, w_trade, b_trade)
    assert out_b.shape == (big_b, _TOTAL_OUT), out_b.shape
    assert jnp.allclose(out_b, ref_b, atol=1e-4, rtol=1e-4), "mismatch (tiled path)"

    print("KERNEL_OK")
</pallas_src>

<mosaic_0001>
module attributes {stable_mosaic.version = 11 : i64} {
  func.func @_player_state_kernel(%arg0: i32, %arg1: memref<8x64xf32, #tpu.memory_space<vmem>>, %arg2: memref<64x128xf32, #tpu.memory_space<vmem>>, %arg3: memref<1x128xf32, #tpu.memory_space<vmem>>, %arg4: memref<8x128xf32, #tpu.memory_space<vmem>>) attributes {dimension_semantics = [#tpu.dimension_semantics<parallel>], iteration_bounds = array<i64: 1>, scalar_prefetch = 0 : i64, scratch_operands = 0 : i64, tpu.core_type = #tpu.core_type<tc>, window_params = [{transform_indices = @transform_0, window_bounds = array<i64: 8, 64>}, {pipeline_mode = #tpu.pipeline_mode<synchronous>, transform_indices = @transform_1, window_bounds = array<i64: 64, 128>}, {pipeline_mode = #tpu.pipeline_mode<synchronous>, transform_indices = @transform_2, window_bounds = array<i64: 1, 128>}, {transform_indices = @transform_3, window_bounds = array<i64: 8, 128>}]} {
    %c0 = arith.constant 0 : index
    %c0_0 = arith.constant 0 : index
    %0 = vector.load %arg1[%c0, %c0_0] : memref<8x64xf32, #tpu.memory_space<vmem>>, vector<8x64xf32>
    %c0_1 = arith.constant 0 : index
    %c0_2 = arith.constant 0 : index
    %1 = vector.load %arg2[%c0_1, %c0_2] : memref<64x128xf32, #tpu.memory_space<vmem>>, vector<64x128xf32>
    %cst = arith.constant dense<0.000000e+00> : vector<8x128xf32>
    %2 = tpu.matmul %0, %1, %cst {dimension_numbers = #tpu.dot_dimension_numbers<[1], [0], [0], [1], [0, 0, 1, 1], [], []>} : vector<8x64xf32>, vector<64x128xf32>, vector<8x128xf32> -> vector<8x128xf32>
    %c0_3 = arith.constant 0 : index
    %c0_4 = arith.constant 0 : index
    %3 = vector.load %arg3[%c0_3, %c0_4] : memref<1x128xf32, #tpu.memory_space<vmem>>, vector<1x128xf32>
    %4 = vector.broadcast %3 : vector<1x128xf32> to vector<8x128xf32>
    %5 = arith.addf %2, %4 : vector<8x128xf32>
    %c0_5 = arith.constant 0 : index
    %c0_6 = arith.constant 0 : index
    %6 = vector.load %arg4[%c0_5, %c0_6] : memref<8x128xf32, #tpu.memory_space<vmem>>, vector<8x128xf32>
    tpu.vector_store %arg4[%c0_5, %c0_6], %5 {strides = array<i32>} : memref<8x128xf32, #tpu.memory_space<vmem>>, vector<8x128xf32>,
    return
  }
  func.func @transform_0(%arg0: i32) -> (i32, i32) {
    %c0_i32 = arith.constant 0 : i32
    %c0_i32_0 = arith.constant 0 : i32
    return %arg0, %c0_i32 : i32, i32
  }
  func.func @transform_1(%arg0: i32) -> (i32, i32) {
    %c0_i32 = arith.constant 0 : i32
    %c0_i32_0 = arith.constant 0 : i32
    %c0_i32_1 = arith.constant 0 : i32
    return %c0_i32, %c0_i32_0 : i32, i32
  }
  func.func @transform_2(%arg0: i32) -> (i32, i32) {
    %c0_i32 = arith.constant 0 : i32
    %c0_i32_0 = arith.constant 0 : i32
    %c0_i32_1 = arith.constant 0 : i32
    return %c0_i32, %c0_i32_0 : i32, i32
  }
  func.func @transform_3(%arg0: i32) -> (i32, i32) {
    %c0_i32 = arith.constant 0 : i32
    %c0_i32_0 = arith.constant 0 : i32
    return %arg0, %c0_i32 : i32, i32
  }
}

</mosaic_0001>

<llo_original>
// kernel: tpu_custom_call.1
$region0: #{tpu_custom_call.1}
  #allocation0 [shape = 'u32[]', space=smem, size = 0x4, offset = 0x4, fixed_abs, tag = 'smem constant byte address 0x4 - core index']
  #allocation1 [shape = 'u32[72,128]{1,0:T(1,128)}', space=vmem, size = 0x9000, scoped, tag = 'internal scratch']
  %s0 = inlined_call_operand.hbm [shape: f32[8,64], index: 0, kind: input, shape index: {}]
  %s1 = inlined_call_operand.hbm [shape: f32[64,128], index: 1, kind: input, shape index: {}]
  %s2 = inlined_call_operand.vmem [shape: f32[1,128], index: 2, kind: input, shape index: {}]
  %s3 = inlined_call_operand.hbm [shape: f32[8,128], index: 3, kind: output, shape index: {}]
  %s4 = sld [smem:[#allocation0]]
  $region30: #{tpu_custom_call.1} parent=0
    _
  %s6 = ssub.s32 1, %s4
  %s7 = scalar_select 0, %s6, %s4
  $region1: #{tpu_custom_call.1} parent=0
    #allocation2 [shape = 'u8[4096]{0}', space=vmem, size = 0x1000, scoped, tag = 'input window, operand 0, single buffered']
    #allocation3 [shape = 's32[1]{0}', space=sflag, size = 0x4, scoped, tag = 'scoped memory for tpu_custom_call.1']
    #allocation4 [shape = 's32[1]{0}', space=sflag, size = 0x4, scoped, tag = 'scoped memory for tpu_custom_call.1']
    #allocation5 [shape = 'u8[32768]{0}', space=vmem, size = 0x8000, scoped, tag = 'input window, operand 1, single buffered']
    #allocation6 [shape = 's32[1]{0}', space=sflag, size = 0x4, scoped, tag = 'scoped memory for tpu_custom_call.1']
    #allocation7 [shape = 'u8[4096]{0}', space=vmem, size = 0x1000, scoped, tag = 'output window, operand 0, single buffered']
    %8 = vsyncpa [#allocation3], 0
    %9 = vsyncpa [#allocation6], 0
    %10 = vsyncpa [#allocation4], 0
    // Predicated region
    $region2: #{tpu_custom_call.1} parent=1 // pred_check
      _
    $region3: #{tpu_custom_call.1} parent=1 // pred_check_branch
      %12 = sbr.rel (0) target = $region5
    $region4: #{tpu_custom_call.1} parent=1 // pred_region
      %14 = vsyncadd [#allocation3], 0
      %s16 = sshll.u32 %s0, 4
      %s17 = int_to_ptr.hbm [resolvable:$true] %s16
      %s18 = sshll.u32 [#allocation2], 4
      %s19 = int_to_ptr.vmem [resolvable:$true] %s18
      %21 = dma.hbm_to_vmem [thread:$0]  %s17, 128, %s19, [#allocation3]
    $region5: #{tpu_custom_call.1} parent=1 // pred_fallthru
      _
    // Predicated region
    $region6: #{tpu_custom_call.1} parent=1 // pred_check
      _
    $region7: #{tpu_custom_call.1} parent=1 // pred_check_branch
      %23 = sbr.rel (0) target = $region9
    $region8: #{tpu_custom_call.1} parent=1 // pred_region
      %25 = vsyncadd [#allocation6], 0
      %s26 = sshll.u32 %s1, 4
      %s27 = int_to_ptr.hbm [resolvable:$true] %s26
      %s28 = sshll.u32 [#allocation5], 4
      %s29 = int_to_ptr.vmem [resolvable:$true] %s28
      %34 = dma.hbm_to_vmem [thread:$0]  %s27, 1024, %s29, [#allocation6], 128, 128, 8
    $region9: #{tpu_custom_call.1} parent=1 // pred_fallthru
      _
    // Predicated region
    $region10: #{tpu_custom_call.1} parent=1 // pred_check
      _
    $region11: #{tpu_custom_call.1} parent=1 // pred_check_branch
      %36 = sbr.rel (0) target = $region13
    $region12: #{tpu_custom_call.1} parent=1 // pred_region
      _
    $region13: #{tpu_custom_call.1} parent=1 // pred_fallthru
      _
    // Predicated region
    $region14: #{tpu_custom_call.1} parent=1 // pred_check
      _
    $region15: #{tpu_custom_call.1} parent=1 // pred_check_branch
      %38 = sbr.rel (0) target = $region17
    $region16: #{tpu_custom_call.1} parent=1 // pred_region
      %40 = dma.done [#allocation3], 128
    $region17: #{tpu_custom_call.1} parent=1 // pred_fallthru
      _
    // Predicated region
    $region18: #{tpu_custom_call.1} parent=1 // pred_check
      _
    $region19: #{tpu_custom_call.1} parent=1 // pred_check_branch
      %42 = sbr.rel (0) target = $region21
    $region20: #{tpu_custom_call.1} parent=1 // pred_region
      %44 = dma.done [#allocation6], 1024
    $region21: #{tpu_custom_call.1} parent=1 // pred_fallthru
      _
    %v45 = vld [vmem:[#allocation2] sm:$0xff]
    %v46 = vld [vmem:[#allocation5] sm:$0xff]
    %v47 = vld [vmem:[#allocation5 + $0x8] sm:$0xff]
    %v48 = vld [vmem:[#allocation5 + $0x10] sm:$0xff]
    %v49 = vld [vmem:[#allocation5 + $0x18] sm:$0xff]
    %v50 = vld [vmem:[#allocation5 + $0x20] sm:$0xff]
    %v51 = vld [vmem:[#allocation5 + $0x28] sm:$0xff]
    %v52 = vld [vmem:[#allocation5 + $0x30] sm:$0xff]
    %v53 = vld [vmem:[#allocation5 + $0x38] sm:$0xff]
    %v54 = vld [vmem:[%s2] sm:$0x1]
    %v56 = vperm.slane %v54, 0
    %vm58 = vcmask 523264
    %v60 = vsel %vm58, %v45, 0
    %62 = vmatpush.msra.mxu0 0.0
    %63 = vmatpush.msra.mxu0 0.0
    %64 = vmatpush.msra.mxu0 0.0
    %65 = vmatpush.msra.mxu0 0.0
    %66 = vmatpush.msra.mxu0 0.0
    %67 = vmatpush.msra.mxu0 0.0
    %68 = vmatpush.msra.mxu0 0.0
    %69 = vmatpush.msra.mxu0 0.0
    %70 = vmatpush.msra.mxu0 %v53
    %71 = vmatpush.msra.mxu0 %v52
    %72 = vmatpush.msra.mxu0 %v51
    %73 = vmatpush.msra.mxu0 %v50
    %74 = vmatpush.msra.mxu0 %v49
    %75 = vmatpush.msra.mxu0 %v48
    %76 = vmatpush.msra.mxu0 %v47
    %77 = vmatpush.msra.mxu0 %v46
    %78 = vmatmul.f32.gmra.mxu0 %v60
    %v79 = vpop.f32.mrf.mxu0
    %v80 = vadd.f32 %v56, %v79
    %81 = vdwg.mxu0
    %82 = vst [vmem:[#allocation7] sm:$0xff] %v80
    // Predicated region
    $region22: #{tpu_custom_call.1} parent=1 // pred_check
      _
    $region23: #{tpu_custom_call.1} parent=1 // pred_check_branch
      %84 = sbr.rel (0) target = $region25
    $region24: #{tpu_custom_call.1} parent=1 // pred_region
      %86 = vsyncadd [#allocation4], 0
      %s88 = sshll.u32 [#allocation7], 4
      %s89 = int_to_ptr.vmem [resolvable:$true] %s88
      %s90 = sshll.u32 %s3, 4
      %s91 = int_to_ptr.hbm [resolvable:$true] %s90
      %93 = dma.vmem_to_hbm [thread:$0]  %s89, 128, %s91, [#allocation4]
    $region25: #{tpu_custom_call.1} parent=1 // pred_fallthru
      _
    // Predicated region
    $region26: #{tpu_custom_call.1} parent=1 // pred_check
      _
    $region27: #{tpu_custom_call.1} parent=1 // pred_check_branch
      %95 = sbr.rel (0) target = $region29
    $region28: #{tpu_custom_call.1} parent=1 // pred_region
      %97 = dma.done [#allocation4], 128
    $region29: #{tpu_custom_call.1} parent=1 // pred_fallthru
      _
    %98 = vsyncpa [#allocation3], 1
    %99 = vsyncpa [#allocation6], 1
    %100 = vsyncpa [#allocation4], 1

</llo_original>
